<compile_context>
chip_gen: v7x
topology: tpu7x:2x2x1
jax: 0.10.0
libtpu: 0.0.40
codegen_flags: <defaults>
</compile_context>

<pallas_src>
import jax
import jax.numpy as jnp
from jax.experimental import pallas as pl
from jax.experimental.pallas import tpu as pltpu

# ----------------------------- configuration ------------------------------
OBS_DIM = 16
HIDDEN = 64
ACTION_DIM = 8
BATCH = 2
MAX_ACTION = 1.0

MAX_BATCH_TILE = 1024     # per review: small tiles are pure overhead here


def _round_up(x, m):
    return (x + m - 1) // m * m


# --------------------------------- kernel ----------------------------------
def actor_mlp_kernel(x_ref, w_ref, b_ref, out_ref):
    """Fused noisy-MLP forward for one batch tile.

    x_ref   (bb, HIDDEN)        f32  obs zero-padded to HIDDEN columns
    w_ref   (4, HIDDEN, HIDDEN) bf16 noisy weights, (in, out) layout, zero-padded
    b_ref   (4, HIDDEN)         f32  noisy biases, zero-padded
    out_ref (bb, HIDDEN)        f32  padded actions (valid cols: [:ACTION_DIM])
    """
    h = x_ref[...]
    # three hidden layers + relu (bf16 MXU inputs, f32 accumulate + f32 VPU math)
    for l in range(3):
        h = jnp.dot(h.astype(jnp.bfloat16), w_ref[l],
                    preferred_element_type=jnp.float32)
        h = jnp.maximum(h + b_ref[l:l + 1, :], 0.0)
    # action layer + scaled tanh (output columns zero-padded to HIDDEN)
    a = jnp.dot(h.astype(jnp.bfloat16), w_ref[3],
                preferred_element_type=jnp.float32) + b_ref[3:4, :]
    out_ref[...] = MAX_ACTION * jnp.tanh(a)


# ------------------------------ call builder --------------------------------
def _build_call(batch_pad):
    bb = min(batch_pad, MAX_BATCH_TILE)
    grid = (pl.cdiv(batch_pad, bb),)
    return pl.pallas_call(
        actor_mlp_kernel,
        out_shape=jax.ShapeDtypeStruct((batch_pad, HIDDEN), jnp.float32),
        grid=grid,
        in_specs=[
            pl.BlockSpec((bb, HIDDEN), lambda i: (i, 0)),                # x tile
            pl.BlockSpec((4, HIDDEN, HIDDEN), lambda i: (0, 0, 0)),      # weights
            pl.BlockSpec((4, HIDDEN), lambda i: (0, 0)),                 # biases
        ],
        out_specs=pl.BlockSpec((bb, HIDDEN), lambda i: (i, 0)),
        compiler_params=pltpu.CompilerParams(
            dimension_semantics=("parallel",)),   # shard batch tiles over TCs (v7x)
    )


# ---------------------- parameters, noise, packing --------------------------
def init_noisy_linear(key, in_f, out_f):
    """Stand-in for the PyTorch uniform_(-0.1, 0.1) init of mean/std params."""
    k1, k2, k3, k4 = jax.random.split(key, 4)
    w_mean = jax.random.uniform(k1, (out_f, in_f), jnp.float32, -0.1, 0.1)
    w_std = jax.random.uniform(k2, (out_f, in_f), jnp.float32, -0.1, 0.1)
    b_mean = jax.random.uniform(k3, (out_f,), jnp.float32, -0.1, 0.1)
    b_std = jax.random.uniform(k4, (out_f,), jnp.float32, -0.1, 0.1)
    return (w_mean, w_std, b_mean, b_std)


def sample_noisy_packed(raw_params, key):
    """Per-forward noise draw (torch.rand ~ U[0,1)) + noisy-weight packing.

    Returns
      w_packed (4, HIDDEN, HIDDEN) bf16  noisy W, (in, out) layout, zero-padded
      b_packed (4, HIDDEN)         f32   noisy biases, zero-padded
    """
    keys = jax.random.split(key, 2 * len(raw_params))
    ws, bs = [], []
    for l, (wm, wstd, bm, bstd) in enumerate(raw_params):
        out_f, in_f = wm.shape
        eps_w = jax.random.uniform(keys[2 * l], (out_f, in_f), jnp.float32)
        eps_b = jax.random.uniform(keys[2 * l + 1], (out_f,), jnp.float32)
        w = (wm + wstd * eps_w).T                      # (in, out)
        b = bm + bstd * eps_b
        w = jnp.pad(w, ((0, HIDDEN - in_f), (0, HIDDEN - out_f)))
        b = jnp.pad(b, (0, HIDDEN - out_f))
        ws.append(w)
        bs.append(b)
    return jnp.stack(ws).astype(jnp.bfloat16), jnp.stack(bs)


# --------------------------------- forward ----------------------------------
@jax.jit
def actor_forward(x, raw_params, key):
    """One noisy-Actor forward; `key` selects this forward's noise."""
    batch, obs = x.shape
    batch_pad = _round_up(max(batch, 8), 8)
    w_packed, b_packed = sample_noisy_packed(raw_params, key)
    x_pad = jnp.zeros((batch_pad, HIDDEN), jnp.float32).at[:batch, :obs].set(x)
    out = _build_call(batch_pad)(x_pad, w_packed, b_packed)
    return out[:batch, :ACTION_DIM]


# ------------------------------- reference ----------------------------------
def reference_forward(x, w_packed, b_packed):
    """Pure-JAX forward using the same packed (bf16-quantized) noisy weights."""
    hp = jax.lax.Precision.HIGHEST
    w = w_packed.astype(jnp.float32)
    b = b_packed
    h = jnp.pad(x, ((0, 0), (0, HIDDEN - x.shape[1])))
    for l in range(3):
        h = jnp.maximum(jnp.dot(h, w[l], precision=hp) + b[l], 0.0)
    a = jnp.dot(h, w[3], precision=hp) + b[3]
    return MAX_ACTION * jnp.tanh(a)[:, :ACTION_DIM]


# ---------------------------------- main -------------------------------------
if __name__ == "__main__":
    root = jax.random.PRNGKey(0)
    k_init, k_x, k_noise = jax.random.split(root, 3)

    layer_dims = [(OBS_DIM, HIDDEN), (HIDDEN, HIDDEN),
                  (HIDDEN, HIDDEN), (HIDDEN, ACTION_DIM)]
    init_keys = jax.random.split(k_init, 4)
    raw_params = [init_noisy_linear(k, i, o)
                  for k, (i, o) in zip(init_keys, layer_dims)]

    x = jax.random.uniform(k_x, (BATCH, OBS_DIM), jnp.float32, -1.0, 1.0)

    actions = jax.block_until_ready(actor_forward(x, raw_params, k_noise))

    # --- structural checks ----------------------------------------------------
    assert actions.shape == (BATCH, ACTION_DIM)
    assert bool(jnp.all(jnp.isfinite(actions)))
    assert bool(jnp.all(jnp.abs(actions) <= MAX_ACTION + 1e-6))

    # same key => same noise => deterministic output
    again = jax.block_until_ready(actor_forward(x, raw_params, k_noise))
    assert bool(jnp.array_equal(actions, again)), "same key must be deterministic"

    # different key => different noise => different output
    other = jax.block_until_ready(
        actor_forward(x, raw_params, jax.random.fold_in(k_noise, 1)))
    assert not bool(jnp.allclose(actions, other, atol=1e-5)), "noise had no effect"

    # --- math check against a pure-JAX reference on the identical noisy weights
    w_packed, b_packed = sample_noisy_packed(raw_params, k_noise)
    ref = reference_forward(x, w_packed, b_packed)
    assert bool(jnp.allclose(actions, ref, atol=3e-3, rtol=3e-3)), \
        "kernel forward does not match reference"

    print("KERNEL_OK")
</pallas_src>

<mosaic_0001>
module attributes {stable_mosaic.version = 11 : i64} {
  func.func @actor_mlp_kernel(%arg0: i32, %arg1: memref<8x64xf32, #tpu.memory_space<vmem>>, %arg2: memref<4x64x64xbf16, #tpu.memory_space<vmem>>, %arg3: memref<4x64xf32, #tpu.memory_space<vmem>>, %arg4: memref<8x64xf32, #tpu.memory_space<vmem>>) attributes {dimension_semantics = [#tpu.dimension_semantics<parallel>], iteration_bounds = array<i64: 1>, scalar_prefetch = 0 : i64, scratch_operands = 0 : i64, tpu.core_type = #tpu.core_type<tc>, window_params = [{transform_indices = @transform_0, window_bounds = array<i64: 8, 64>}, {pipeline_mode = #tpu.pipeline_mode<synchronous>, transform_indices = @transform_1, window_bounds = array<i64: 4, 64, 64>}, {pipeline_mode = #tpu.pipeline_mode<synchronous>, transform_indices = @transform_2, window_bounds = array<i64: 4, 64>}, {transform_indices = @transform_3, window_bounds = array<i64: 8, 64>}]} {
    %c0 = arith.constant 0 : index
    %c0_0 = arith.constant 0 : index
    %0 = vector.load %arg1[%c0, %c0_0] : memref<8x64xf32, #tpu.memory_space<vmem>>, vector<8x64xf32>
    %1 = arith.truncf %0 : vector<8x64xf32> to vector<8x64xbf16>
    %c0_1 = arith.constant 0 : index
    %c0_2 = arith.constant 0 : index
    %c0_3 = arith.constant 0 : index
    %2 = vector.load %arg2[%c0_1, %c0_2, %c0_3] : memref<4x64x64xbf16, #tpu.memory_space<vmem>>, vector<1x64x64xbf16>
    %3 = vector.shape_cast %2 : vector<1x64x64xbf16> to vector<64x64xbf16>
    %cst = arith.constant dense<0.000000e+00> : vector<8x64xf32>
    %4 = tpu.matmul %1, %3, %cst {dimension_numbers = #tpu.dot_dimension_numbers<[1], [0], [0], [1], [0, 0, 1, 1], [], []>} : vector<8x64xbf16>, vector<64x64xbf16>, vector<8x64xf32> -> vector<8x64xf32>
    %c0_4 = arith.constant 0 : index
    %c0_5 = arith.constant 0 : index
    %5 = vector.load %arg3[%c0_4, %c0_5] : memref<4x64xf32, #tpu.memory_space<vmem>>, vector<1x64xf32>
    %6 = vector.broadcast %5 : vector<1x64xf32> to vector<8x64xf32>
    %7 = arith.addf %4, %6 : vector<8x64xf32>
    %cst_6 = arith.constant 0.000000e+00 : f32
    %8 = vector.broadcast %cst_6 : f32 to vector<8x64xf32>
    %9 = arith.maximumf %7, %8 : vector<8x64xf32>
    %10 = arith.truncf %9 : vector<8x64xf32> to vector<8x64xbf16>
    %c1 = arith.constant 1 : index
    %c0_7 = arith.constant 0 : index
    %c0_8 = arith.constant 0 : index
    %11 = vector.load %arg2[%c1, %c0_7, %c0_8] : memref<4x64x64xbf16, #tpu.memory_space<vmem>>, vector<1x64x64xbf16>
    %12 = vector.shape_cast %11 : vector<1x64x64xbf16> to vector<64x64xbf16>
    %cst_9 = arith.constant dense<0.000000e+00> : vector<8x64xf32>
    %13 = tpu.matmul %10, %12, %cst_9 {dimension_numbers = #tpu.dot_dimension_numbers<[1], [0], [0], [1], [0, 0, 1, 1], [], []>} : vector<8x64xbf16>, vector<64x64xbf16>, vector<8x64xf32> -> vector<8x64xf32>
    %c1_10 = arith.constant 1 : index
    %c0_11 = arith.constant 0 : index
    %14 = vector.load %arg3[%c1_10, %c0_11] : memref<4x64xf32, #tpu.memory_space<vmem>>, vector<1x64xf32>
    %15 = vector.broadcast %14 : vector<1x64xf32> to vector<8x64xf32>
    %16 = arith.addf %13, %15 : vector<8x64xf32>
    %cst_12 = arith.constant 0.000000e+00 : f32
    %17 = vector.broadcast %cst_12 : f32 to vector<8x64xf32>
    %18 = arith.maximumf %16, %17 : vector<8x64xf32>
    %19 = arith.truncf %18 : vector<8x64xf32> to vector<8x64xbf16>
    %c2 = arith.constant 2 : index
    %c0_13 = arith.constant 0 : index
    %c0_14 = arith.constant 0 : index
    %20 = vector.load %arg2[%c2, %c0_13, %c0_14] : memref<4x64x64xbf16, #tpu.memory_space<vmem>>, vector<1x64x64xbf16>
    %21 = vector.shape_cast %20 : vector<1x64x64xbf16> to vector<64x64xbf16>
    %cst_15 = arith.constant dense<0.000000e+00> : vector<8x64xf32>
    %22 = tpu.matmul %19, %21, %cst_15 {dimension_numbers = #tpu.dot_dimension_numbers<[1], [0], [0], [1], [0, 0, 1, 1], [], []>} : vector<8x64xbf16>, vector<64x64xbf16>, vector<8x64xf32> -> vector<8x64xf32>
    %c2_16 = arith.constant 2 : index
    %c0_17 = arith.constant 0 : index
    %23 = vector.load %arg3[%c2_16, %c0_17] : memref<4x64xf32, #tpu.memory_space<vmem>>, vector<1x64xf32>
    %24 = vector.broadcast %23 : vector<1x64xf32> to vector<8x64xf32>
    %25 = arith.addf %22, %24 : vector<8x64xf32>
    %cst_18 = arith.constant 0.000000e+00 : f32
    %26 = vector.broadcast %cst_18 : f32 to vector<8x64xf32>
    %27 = arith.maximumf %25, %26 : vector<8x64xf32>
    %28 = arith.truncf %27 : vector<8x64xf32> to vector<8x64xbf16>
    %c3 = arith.constant 3 : index
    %c0_19 = arith.constant 0 : index
    %c0_20 = arith.constant 0 : index
    %29 = vector.load %arg2[%c3, %c0_19, %c0_20] : memref<4x64x64xbf16, #tpu.memory_space<vmem>>, vector<1x64x64xbf16>
    %30 = vector.shape_cast %29 : vector<1x64x64xbf16> to vector<64x64xbf16>
    %cst_21 = arith.constant dense<0.000000e+00> : vector<8x64xf32>
    %31 = tpu.matmul %28, %30, %cst_21 {dimension_numbers = #tpu.dot_dimension_numbers<[1], [0], [0], [1], [0, 0, 1, 1], [], []>} : vector<8x64xbf16>, vector<64x64xbf16>, vector<8x64xf32> -> vector<8x64xf32>
    %c3_22 = arith.constant 3 : index
    %c0_23 = arith.constant 0 : index
    %32 = vector.load %arg3[%c3_22, %c0_23] : memref<4x64xf32, #tpu.memory_space<vmem>>, vector<1x64xf32>
    %33 = vector.broadcast %32 : vector<1x64xf32> to vector<8x64xf32>
    %34 = arith.addf %31, %33 : vector<8x64xf32>
    %35 = math.tanh %34 : vector<8x64xf32>
    %cst_24 = arith.constant 1.000000e+00 : f32
    %36 = vector.broadcast %cst_24 : f32 to vector<8x64xf32>
    %37 = arith.mulf %36, %35 : vector<8x64xf32>
    %c0_25 = arith.constant 0 : index
    %c0_26 = arith.constant 0 : index
    %38 = vector.load %arg4[%c0_25, %c0_26] : memref<8x64xf32, #tpu.memory_space<vmem>>, vector<8x64xf32>
    tpu.vector_store %arg4[%c0_25, %c0_26], %37 {strides = array<i32>} : memref<8x64xf32, #tpu.memory_space<vmem>>, vector<8x64xf32>,
    return
  }
  func.func @transform_0(%arg0: i32) -> (i32, i32) {
    %c0_i32 = arith.constant 0 : i32
    %c0_i32_0 = arith.constant 0 : i32
    return %arg0, %c0_i32 : i32, i32
  }
  func.func @transform_1(%arg0: i32) -> (i32, i32, i32) {
    %c0_i32 = arith.constant 0 : i32
    %c0_i32_0 = arith.constant 0 : i32
    %c0_i32_1 = arith.constant 0 : i32
    %c0_i32_2 = arith.constant 0 : i32
    return %c0_i32, %c0_i32_0, %c0_i32_1 : i32, i32, i32
  }
  func.func @transform_2(%arg0: i32) -> (i32, i32) {
    %c0_i32 = arith.constant 0 : i32
    %c0_i32_0 = arith.constant 0 : i32
    %c0_i32_1 = arith.constant 0 : i32
    return %c0_i32, %c0_i32_0 : i32, i32
  }
  func.func @transform_3(%arg0: i32) -> (i32, i32) {
    %c0_i32 = arith.constant 0 : i32
    %c0_i32_0 = arith.constant 0 : i32
    return %arg0, %c0_i32 : i32, i32
  }
}

</mosaic_0001>

<llo_original>
// kernel: actor_forward.1
$region0: #{actor_forward.1}
  #allocation0 [shape = 'u32[]', space=smem, size = 0x4, offset = 0x4, fixed_abs, tag = 'smem constant byte address 0x4 - core index']
  #allocation1 [shape = 'u32[144,128]{1,0:T(1,128)}', space=vmem, size = 0x12000, scoped, tag = 'internal scratch']
  %s0 = inlined_call_operand.vmem [shape: f32[8,64], index: 0, kind: input, shape index: {}]
  %s1 = inlined_call_operand.vmem [shape: bf16[4,64,64], index: 1, kind: input, shape index: {}]
  %s2 = inlined_call_operand.vmem [shape: f32[4,64], index: 2, kind: input, shape index: {}]
  %s3 = inlined_call_operand.vmem [shape: f32[8,64], index: 3, kind: output, shape index: {}]
  %s4 = sld [smem:[#allocation0]]
  $region22: #{actor_forward.1} parent=0
    _
  %s6 = ssub.s32 1, %s4
  %s7 = scalar_select 0, %s6, %s4
  // Predicated region
  $region2: #{actor_forward.1} parent=0 // pred_check
    _
  $region3: #{actor_forward.1} parent=0 // pred_check_branch
    %9 = sbr.rel (0) target = $region5
  $region4: #{actor_forward.1} parent=0 // pred_region
    _
  $region5: #{actor_forward.1} parent=0 // pred_fallthru
    _
  // Predicated region
  $region6: #{actor_forward.1} parent=0 // pred_check
    _
  $region7: #{actor_forward.1} parent=0 // pred_check_branch
    %11 = sbr.rel (0) target = $region9
  $region8: #{actor_forward.1} parent=0 // pred_region
    _
  $region9: #{actor_forward.1} parent=0 // pred_fallthru
    _
  // Predicated region
  $region10: #{actor_forward.1} parent=0 // pred_check
    _
  $region11: #{actor_forward.1} parent=0 // pred_check_branch
    %13 = sbr.rel (0) target = $region13
  $region12: #{actor_forward.1} parent=0 // pred_region
    _
  $region13: #{actor_forward.1} parent=0 // pred_fallthru
    _
  %v15 = vld [vmem:[%s0] sm:$0xff]
  %v16 = vpack.c.bf16 %v15, %v15
  %v17 = vld [vmem:[%s1] sm:$0xf]
  %v18 = vld [vmem:[%s1 + $0x4] sm:$0xf]
  %v19 = vld [vmem:[%s1 + $0x8] sm:$0xf]
  %v20 = vld [vmem:[%s1 + $0xc] sm:$0xf]
  %v21 = vld [vmem:[%s1 + $0x10] sm:$0xf]
  %v22 = vld [vmem:[%s1 + $0x14] sm:$0xf]
  %v23 = vld [vmem:[%s1 + $0x18] sm:$0xf]
  %v24 = vld [vmem:[%s1 + $0x1c] sm:$0xf]
  %v25 = vld [vmem:[%s2] sm:$0x1]
  %v26 = vlaneseq
  %v27 = vshrl.u32 %v26, 7
  %v28 = vsub.s32 0, %v27
  %v29 = vrot.slane %v25, %v28
  %v38 = vunpack.c.l.b16 %v17
  %v39 = vunpack.c.l.b16 %v18
  %v40 = vunpack.c.l.b16 %v19
  %v41 = vunpack.c.l.b16 %v20
  %v42 = vunpack.c.l.b16 %v21
  %v43 = vunpack.c.l.b16 %v22
  %v44 = vunpack.c.l.b16 %v23
  %v45 = vunpack.c.l.b16 %v24
  %v46 = vpack.c.b16 %v39, %v38
  %v47 = vpack.c.b16 %v41, %v40
  %v48 = vpack.c.b16 %v43, %v42
  %v49 = vpack.c.b16 %v45, %v44
  %vm54 = vcmask 523264
  %v56 = vsel %vm54, %v16, 0
  %58 = vmatprep.subr.bf16.mxu0 0
  %59 = vmatpush1.bf16.msra.mxu0 %v46
  %60 = vmatprep.subr.bf16.mxu0 0
  %61 = vmatpush1.bf16.msra.mxu0 %v47
  %62 = vmatprep.subr.bf16.mxu0 0
  %63 = vmatpush1.bf16.msra.mxu0 %v48
  %64 = vmatprep.subr.bf16.mxu0 0
  %65 = vmatpush1.bf16.msra.mxu0 %v49
  %66 = vmatprep.subr.bf16.mxu0 0
  %67 = vmatpush1.bf16.msra.mxu0 0
  %68 = vmatprep.subr.bf16.mxu0 0
  %69 = vmatpush1.bf16.msra.mxu0 0
  %70 = vmatprep.subr.bf16.mxu0 0
  %71 = vmatpush1.bf16.msra.mxu0 0
  %72 = vmatprep.subr.bf16.mxu0 0
  %73 = vmatpush1.bf16.msra.mxu0 0
  %74 = vmatprep.subr.bf16.mxu0 0
  %75 = vmatpush1.bf16.msra.mxu0 0
  %76 = vmatprep.subr.bf16.mxu0 0
  %77 = vmatpush1.bf16.msra.mxu0 0
  %78 = vmatprep.subr.bf16.mxu0 0
  %79 = vmatpush1.bf16.msra.mxu0 0
  %80 = vmatprep.subr.bf16.mxu0 0
  %81 = vmatpush1.bf16.msra.mxu0 0
  %82 = vmatprep.subr.bf16.mxu0 0
  %83 = vmatpush1.bf16.msra.mxu0 0
  %84 = vmatprep.subr.bf16.mxu0 0
  %85 = vmatpush1.bf16.msra.mxu0 0
  %86 = vmatprep.subr.bf16.mxu0 0
  %87 = vmatpush1.bf16.msra.mxu0 0
  %88 = vmatprep.subr.bf16.mxu0 0
  %89 = vmatpush1.bf16.msra.mxu0 0
  %90 = vmatprep.mubr.bf16.mxu0 0
  %91 = vmatmul.mubr.bf16.gmra.mrb[0].mxu0 %v56
  %v92 = vpop.f32.mrb[0].mxu0
  %v93 = vadd.f32 %v29, %v92
  %v94 = vpop.f32.mrb[0].mxu0
  %v95 = vpop.f32.mrb[0].mxu0
  %v96 = vpop.f32.mrb[0].mxu0
  %97 = vdwg.mxu0
  %v98 = vmax.f32 %v93, 0.0
  %v99 = vpack.c.bf16 %v98, %v98
  %s100 = scalar_lea.vmem %s1, 32
  %v101 = vld [vmem:[%s100] sm:$0xf]
  %v102 = vld [vmem:[%s100 + $0x4] sm:$0xf]
  %v103 = vld [vmem:[%s100 + $0x8] sm:$0xf]
  %v104 = vld [vmem:[%s100 + $0xc] sm:$0xf]
  %v105 = vld [vmem:[%s100 + $0x10] sm:$0xf]
  %v106 = vld [vmem:[%s100 + $0x14] sm:$0xf]
  %v107 = vld [vmem:[%s100 + $0x18] sm:$0xf]
  %v108 = vld [vmem:[%s100 + $0x1c] sm:$0xf]
  %v109 = vld [vmem:[%s2 + $0x1] sm:$0x1]
  %v110 = vlaneseq
  %v111 = vshrl.u32 %v110, 7
  %v112 = vsub.s32 0, %v111
  %v113 = vrot.slane %v109, %v112
  %v122 = vunpack.c.l.b16 %v101
  %v123 = vunpack.c.l.b16 %v102
  %v124 = vunpack.c.l.b16 %v103
  %v125 = vunpack.c.l.b16 %v104
  %v126 = vunpack.c.l.b16 %v105
  %v127 = vunpack.c.l.b16 %v106
  %v128 = vunpack.c.l.b16 %v107
  %v129 = vunpack.c.l.b16 %v108
  %v130 = vpack.c.b16 %v123, %v122
  %v131 = vpack.c.b16 %v125, %v124
  %v132 = vpack.c.b16 %v127, %v126
  %v133 = vpack.c.b16 %v129, %v128
  %v139 = vsel %vm54, %v99, 0
  %141 = vmatprep.subr.bf16.mxu0 0
  %142 = vmatpush1.bf16.msra.mxu0 %v130
  %143 = vmatprep.subr.bf16.mxu0 0
  %144 = vmatpush1.bf16.msra.mxu0 %v131
  %145 = vmatprep.subr.bf16.mxu0 0
  %146 = vmatpush1.bf16.msra.mxu0 %v132
  %147 = vmatprep.subr.bf16.mxu0 0
  %148 = vmatpush1.bf16.msra.mxu0 %v133
  %149 = vmatprep.subr.bf16.mxu0 0
  %150 = vmatpush1.bf16.msra.mxu0 0
  %151 = vmatprep.subr.bf16.mxu0 0
  %152 = vmatpush1.bf16.msra.mxu0 0
  %153 = vmatprep.subr.bf16.mxu0 0
  %154 = vmatpush1.bf16.msra.mxu0 0
  %155 = vmatprep.subr.bf16.mxu0 0
  %156 = vmatpush1.bf16.msra.mxu0 0
  %157 = vmatprep.subr.bf16.mxu0 0
  %158 = vmatpush1.bf16.msra.mxu0 0
  %159 = vmatprep.subr.bf16.mxu0 0
  %160 = vmatpush1.bf16.msra.mxu0 0
  %161 = vmatprep.subr.bf16.mxu0 0
  %162 = vmatpush1.bf16.msra.mxu0 0
  %163 = vmatprep.subr.bf16.mxu0 0
  %164 = vmatpush1.bf16.msra.mxu0 0
  %165 = vmatprep.subr.bf16.mxu0 0
  %166 = vmatpush1.bf16.msra.mxu0 0
  %167 = vmatprep.subr.bf16.mxu0 0
  %168 = vmatpush1.bf16.msra.mxu0 0
  %169 = vmatprep.subr.bf16.mxu0 0
  %170 = vmatpush1.bf16.msra.mxu0 0
  %171 = vmatprep.subr.bf16.mxu0 0
  %172 = vmatpush1.bf16.msra.mxu0 0
  %173 = vmatprep.mubr.bf16.mxu0 0
  %174 = vmatmul.mubr.bf16.gmra.mrb[0].mxu0 %v139
  %v175 = vpop.f32.mrb[0].mxu0
  %v176 = vadd.f32 %v113, %v175
  %v177 = vpop.f32.mrb[0].mxu0
  %v178 = vpop.f32.mrb[0].mxu0
  %v179 = vpop.f32.mrb[0].mxu0
  %180 = vdwg.mxu0
  %v181 = vmax.f32 %v176, 0.0
  %v182 = vpack.c.bf16 %v181, %v181
  %s183 = scalar_lea.vmem %s1, 64
  %v184 = vld [vmem:[%s183] sm:$0xf]
  %v185 = vld [vmem:[%s183 + $0x4] sm:$0xf]
  %v186 = vld [vmem:[%s183 + $0x8] sm:$0xf]
  %v187 = vld [vmem:[%s183 + $0xc] sm:$0xf]
  %v188 = vld [vmem:[%s183 + $0x10] sm:$0xf]
  %v189 = vld [vmem:[%s183 + $0x14] sm:$0xf]
  %v190 = vld [vmem:[%s183 + $0x18] sm:$0xf]
  %v191 = vld [vmem:[%s183 + $0x1c] sm:$0xf]
  %v192 = vld [vmem:[%s2 + $0x2] sm:$0x1]
  %v193 = vlaneseq
  %v194 = vshrl.u32 %v193, 7
  %v195 = vsub.s32 0, %v194
  %v196 = vrot.slane %v192, %v195
  %v205 = vunpack.c.l.b16 %v184
  %v206 = vunpack.c.l.b16 %v185
  %v207 = vunpack.c.l.b16 %v186
  %v208 = vunpack.c.l.b16 %v187
  %v209 = vunpack.c.l.b16 %v188
  %v210 = vunpack.c.l.b16 %v189
  %v211 = vunpack.c.l.b16 %v190
  %v212 = vunpack.c.l.b16 %v191
  %v213 = vpack.c.b16 %v206, %v205
  %v214 = vpack.c.b16 %v208, %v207
  %v215 = vpack.c.b16 %v210, %v209
  %v216 = vpack.c.b16 %v212, %v211
  %v222 = vsel %vm54, %v182, 0
  %224 = vmatprep.subr.bf16.mxu0 0
  %225 = vmatpush1.bf16.msra.mxu0 %v213
  %226 = vmatprep.subr.bf16.mxu0 0
  %227 = vmatpush1.bf16.msra.mxu0 %v214
  %228 = vmatprep.subr.bf16.mxu0 0
  %229 = vmatpush1.bf16.msra.mxu0 %v215
  %230 = vmatprep.subr.bf16.mxu0 0
  %231 = vmatpush1.bf16.msra.mxu0 %v216
  %232 = vmatprep.subr.bf16.mxu0 0
  %233 = vmatpush1.bf16.msra.mxu0 0
  %234 = vmatprep.subr.bf16.mxu0 0
  %235 = vmatpush1.bf16.msra.mxu0 0
  %236 = vmatprep.subr.bf16.mxu0 0
  %237 = vmatpush1.bf16.msra.mxu0 0
  %238 = vmatprep.subr.bf16.mxu0 0
  %239 = vmatpush1.bf16.msra.mxu0 0
  %240 = vmatprep.subr.bf16.mxu0 0
  %241 = vmatpush1.bf16.msra.mxu0 0
  %242 = vmatprep.subr.bf16.mxu0 0
  %243 = vmatpush1.bf16.msra.mxu0 0
  %244 = vmatprep.subr.bf16.mxu0 0
  %245 = vmatpush1.bf16.msra.mxu0 0
  %246 = vmatprep.subr.bf16.mxu0 0
  %247 = vmatpush1.bf16.msra.mxu0 0
  %248 = vmatprep.subr.bf16.mxu0 0
  %249 = vmatpush1.bf16.msra.mxu0 0
  %250 = vmatprep.subr.bf16.mxu0 0
  %251 = vmatpush1.bf16.msra.mxu0 0
  %252 = vmatprep.subr.bf16.mxu0 0
  %253 = vmatpush1.bf16.msra.mxu0 0
  %254 = vmatprep.subr.bf16.mxu0 0
  %255 = vmatpush1.bf16.msra.mxu0 0
  %256 = vmatprep.mubr.bf16.mxu0 0
  %257 = vmatmul.mubr.bf16.gmra.mrb[0].mxu0 %v222
  %v258 = vpop.f32.mrb[0].mxu0
  %v259 = vadd.f32 %v196, %v258
  %v260 = vpop.f32.mrb[0].mxu0
  %v261 = vpop.f32.mrb[0].mxu0
  %v262 = vpop.f32.mrb[0].mxu0
  %263 = vdwg.mxu0
  %v264 = vmax.f32 %v259, 0.0
  %v265 = vpack.c.bf16 %v264, %v264
  %s266 = scalar_lea.vmem %s1, 96
  %v267 = vld [vmem:[%s266] sm:$0xf]
  %v268 = vld [vmem:[%s266 + $0x4] sm:$0xf]
  %v269 = vld [vmem:[%s266 + $0x8] sm:$0xf]
  %v270 = vld [vmem:[%s266 + $0xc] sm:$0xf]
  %v271 = vld [vmem:[%s266 + $0x10] sm:$0xf]
  %v272 = vld [vmem:[%s266 + $0x14] sm:$0xf]
  %v273 = vld [vmem:[%s266 + $0x18] sm:$0xf]
  %v274 = vld [vmem:[%s266 + $0x1c] sm:$0xf]
  %v275 = vld [vmem:[%s2 + $0x3] sm:$0x1]
  %v276 = vlaneseq
  %v277 = vshrl.u32 %v276, 7
  %v278 = vsub.s32 0, %v277
  %v279 = vrot.slane %v275, %v278
  %v288 = vunpack.c.l.b16 %v267
  %v289 = vunpack.c.l.b16 %v268
  %v290 = vunpack.c.l.b16 %v269
  %v291 = vunpack.c.l.b16 %v270
  %v292 = vunpack.c.l.b16 %v271
  %v293 = vunpack.c.l.b16 %v272
  %v294 = vunpack.c.l.b16 %v273
  %v295 = vunpack.c.l.b16 %v274
  %v296 = vpack.c.b16 %v289, %v288
  %v297 = vpack.c.b16 %v291, %v290
  %v298 = vpack.c.b16 %v293, %v292
  %v299 = vpack.c.b16 %v295, %v294
  %v305 = vsel %vm54, %v265, 0
  %307 = vmatprep.subr.bf16.mxu0 0
  %308 = vmatpush1.bf16.msra.mxu0 %v296
  %309 = vmatprep.subr.bf16.mxu0 0
  %310 = vmatpush1.bf16.msra.mxu0 %v297
  %311 = vmatprep.subr.bf16.mxu0 0
  %312 = vmatpush1.bf16.msra.mxu0 %v298
  %313 = vmatprep.subr.bf16.mxu0 0
  %314 = vmatpush1.bf16.msra.mxu0 %v299
  %315 = vmatprep.subr.bf16.mxu0 0
  %316 = vmatpush1.bf16.msra.mxu0 0
  %317 = vmatprep.subr.bf16.mxu0 0
  %318 = vmatpush1.bf16.msra.mxu0 0
  %319 = vmatprep.subr.bf16.mxu0 0
  %320 = vmatpush1.bf16.msra.mxu0 0
  %321 = vmatprep.subr.bf16.mxu0 0
  %322 = vmatpush1.bf16.msra.mxu0 0
  %323 = vmatprep.subr.bf16.mxu0 0
  %324 = vmatpush1.bf16.msra.mxu0 0
  %325 = vmatprep.subr.bf16.mxu0 0
  %326 = vmatpush1.bf16.msra.mxu0 0
  %327 = vmatprep.subr.bf16.mxu0 0
  %328 = vmatpush1.bf16.msra.mxu0 0
  %329 = vmatprep.subr.bf16.mxu0 0
  %330 = vmatpush1.bf16.msra.mxu0 0
  %331 = vmatprep.subr.bf16.mxu0 0
  %332 = vmatpush1.bf16.msra.mxu0 0
  %333 = vmatprep.subr.bf16.mxu0 0
  %334 = vmatpush1.bf16.msra.mxu0 0
  %335 = vmatprep.subr.bf16.mxu0 0
  %336 = vmatpush1.bf16.msra.mxu0 0
  %337 = vmatprep.subr.bf16.mxu0 0
  %338 = vmatpush1.bf16.msra.mxu0 0
  %339 = vmatprep.mubr.bf16.mxu0 0
  %340 = vmatmul.mubr.bf16.gmra.mrb[0].mxu0 %v305
  %v341 = vpop.f32.mrb[0].mxu0
  %v342 = vadd.f32 %v279, %v341
  %v343 = vpop.f32.mrb[0].mxu0
  %v344 = vpop.f32.mrb[0].mxu0
  %v345 = vpop.f32.mrb[0].mxu0
  %346 = vdwg.mxu0
  %v347 = vtanh.pop %v342
  %348 = vst.msk [vmem:[%s3] sm:$0xff] %vm54, %v347
  // Predicated region
  $region14: #{actor_forward.1} parent=0 // pred_check
    _
  $region15: #{actor_forward.1} parent=0 // pred_check_branch
    %350 = sbr.rel (0) target = $region17
  $region16: #{actor_forward.1} parent=0 // pred_region
    _
  $region17: #{actor_forward.1} parent=0 // pred_fallthru
    _
  // Predicated region
  $region18: #{actor_forward.1} parent=0 // pred_check
    _
  $region19: #{actor_forward.1} parent=0 // pred_check_branch
    %352 = sbr.rel (0) target = $region21
  $region20: #{actor_forward.1} parent=0 // pred_region
    _
  $region21: #{actor_forward.1} parent=0 // pred_fallthru
    _

</llo_original>
